<compile_context>
chip_gen: v7x
topology: tpu7x:2x2x1
jax: 0.10.0
libtpu: 0.0.40
codegen_flags: <defaults>
</compile_context>

<pallas_src>
import numpy as np
import jax
import jax.numpy as jnp
from jax.experimental import pallas as pl
from jax.experimental.pallas import tpu as pltpu

KSIZE_G = 7          # GaussianBlur kernel_size
SIGMA_G = 2.0        # GaussianBlur sigma
KSIZE_L = 5          # Laplacian kernel size
PAD_L = 2            # trailing Pad(padding=2, padding_mode='edge')
THRESHOLD_PCT = 2.0  # module arg `threshold`

HALO = 16            # halo rows per strip (>= 6 blur + 4 laplacian), mult. of 8
MAX_STRIP_ROWS = 128 # Laplacian rows per grid step (multiple of HALO)


def _gaussian_kernel1d():
    # matches torchvision._get_gaussian_kernel1d(7, 2.0)
    half = (KSIZE_G - 1) * 0.5
    xs = np.linspace(-half, half, KSIZE_G)
    pdf = np.exp(-0.5 * (xs / SIGMA_G) ** 2)
    return (pdf / pdf.sum()).astype(np.float64)


def _make_lap_kernel(smooth: bool, TL: int, W: int, Wk: int):
    """Per-strip: [separable 7x7 Gaussian] -> 5x5 Laplacian -> column edge Pad(2)."""
    g = [float(v) for v in _gaussian_kernel1d()]
    BR = TL + KSIZE_L - 1        # blurred rows needed per strip
    Wv = W - (KSIZE_L - 1)       # valid Laplacian width

    def kernel(xm_ref, xh_ref, o_ref):
        # main strip + 16-row halo block of the same array (both plain Blocked,
        # auto double-buffered); only ~10 halo rows per strip are re-read.
        x = jnp.concatenate([xm_ref[0], xh_ref[0]], axis=0)          # (TL+HALO, Wk)

        if smooth:
            # separable Gaussian; input is channel-summed and reflect-padded
            # by 3 on both axes in the wrapper -> uniform math in every strip.
            v = g[0] * x[0:BR, :]
            for dy in range(1, KSIZE_G):                             # sublane shifts
                v = v + g[dy] * x[dy:dy + BR, :]                     # (BR, Wk)
            b = g[0] * v[:, 0:W]
            for dx in range(1, KSIZE_G):                             # lane shifts (XLU)
                b = b + g[dx] * v[:, dx:dx + W]                      # (BR, W)
        else:
            b = x[0:BR, :]                                           # Wk == W

        # 5x5 Laplacian: vertical combine first (kernel rows 0==4 and 1==3),
        # then the 9 non-zero column taps as shifted FMAs (no MXU, no W^2).
        ta = b[0:TL, :] + b[4:TL + 4, :]        # taps ( 0,  0, -1,  0,  0)
        tb = b[1:TL + 1, :] + b[3:TL + 3, :]    # taps ( 0, -1, -2, -1,  0)
        tc = b[2:TL + 2, :]                     # taps (-1, -2, 16, -2, -1)
        lv = (-ta[:, 2:2 + Wv]
              - tb[:, 1:1 + Wv] - 2.0 * tb[:, 2:2 + Wv] - tb[:, 3:3 + Wv]
              - tc[:, 0:Wv] - 2.0 * tc[:, 1:1 + Wv] + 16.0 * tc[:, 2:2 + Wv]
              - 2.0 * tc[:, 3:3 + Wv] - tc[:, 4:4 + Wv])             # (TL, W-4)

        # column edge Pad(2) fused into the store -> lane-dense full-W block.
        left = jnp.broadcast_to(lv[:, 0:1], (TL, PAD_L))
        right = jnp.broadcast_to(lv[:, Wv - 1:Wv], (TL, PAD_L))
        o_ref[0, 0] = jnp.concatenate([left, lv, right], axis=1)     # (TL, W)

    return kernel


def _threshold_norm_kernel(sc_ref, x_ref, o_ref):
    # sc = [quantile threshold, global min of thresholded img, 1/(max - min)]
    thr = sc_ref[0]
    gmin = sc_ref[1]
    inv = sc_ref[2]
    x = x_ref[...]
    y = jnp.where(x > thr, x, 0.0)      # F.threshold(img, thr, 0)
    o_ref[...] = (y - gmin) * inv       # img -= min; img /= max


def laplacian_filter(img, threshold: float = THRESHOLD_PCT,
                     gaussian_smoothed: bool = True):
    """JAX/Pallas equivalent of LaplacianFilter.forward.  img: (N, 3, H, W)."""
    N, C, H, W = img.shape
    HL = H - (KSIZE_L - 1)
    img = img.astype(jnp.float32)

    # Channel sum FIRST (per-channel blur kernel and per-channel Laplacian
    # weights are identical, so sum/blur/conv commute).  The single wrapper
    # pre-pass (fused sum + reflect pad) runs on the 1-channel plane.
    s = jnp.sum(img, axis=1)                                         # (N, H, W)
    if gaussian_smoothed:
        p = KSIZE_G // 2
        s = jnp.pad(s, ((0, 0), (p, p), (p, p)), mode="reflect")     # (N, H+6, W+6)
    base_rows, Wk = s.shape[1], s.shape[2]

    # Row-strip tiling: strip si computes Laplacian rows [si*TL, si*TL+TL).
    TL = min(MAX_STRIP_ROWS, -(-HL // HALO) * HALO)   # multiple of HALO
    ns = -(-HL // TL)
    R = ns * TL + HALO
    s = jnp.pad(s, ((0, 0), (0, R - base_rows), (0, 0)))  # bottom fill rows (unused)

    # Derive the scoped-VMEM limit from the chip instead of hard-coding 64 MiB
    # (v7x only has 64 MiB physical per TensorCore).
    try:
        vmem_cap = int(pltpu.get_tpu_info().vmem_capacity_bytes)
    except Exception:
        vmem_cap = 0
    if vmem_cap <= 0:
        vmem_cap = 64 * 1024 * 1024
    vmem_limit = int(min(vmem_cap * 3 // 4, 96 * 1024 * 1024))

    if gaussian_smoothed:
        flops = N * (28 * H * Wk + 24 * HL * W)
    else:
        flops = N * 24 * HL * W
    bytes_accessed = 4 * N * (R * Wk + ns * TL * W)

    # Kernel 1: strip-tiled blur + Laplacian + fused column edge Pad(2).
    lap = pl.pallas_call(
        _make_lap_kernel(gaussian_smoothed, TL, W, Wk),
        out_shape=jax.ShapeDtypeStruct((N, 1, ns * TL, W), jnp.float32),
        grid=(N, ns),
        in_specs=[pl.BlockSpec((1, TL, Wk), lambda n, si: (n, si, 0)),
                  pl.BlockSpec((1, HALO, Wk),
                               lambda n, si: (n, (si + 1) * (TL // HALO), 0))],
        out_specs=pl.BlockSpec((1, 1, TL, W), lambda n, si: (n, 0, si, 0)),
        compiler_params=pltpu.CompilerParams(
            dimension_semantics=("parallel", "parallel"),
            vmem_limit_bytes=vmem_limit),
        cost_estimate=pl.CostEstimate(flops=int(flops), transcendentals=0,
                                      bytes_accessed=int(bytes_accessed)),
    )(s, s)

    # Row edge Pad(2): replicate 2 rows top/bottom on the 1-channel result
    # (column pad was already fused into kernel 1; strip fill rows dropped).
    lap = lap[:, :, :HL, :]
    lap_p = jnp.pad(lap, ((0, 0), (0, 0), (PAD_L, PAD_L), (0, 0)), mode="edge")

    # Global (whole-tensor, batch included) quantile / min / max, exactly as
    # torch's img.quantile / img.min / img.max do.
    # TODO(synk): a two-pass histogram quantile would avoid the global sort,
    # but is not bit-identical to torch.quantile near the cut; kept exact.
    q = 1.0 - threshold / 100.0
    thr = jnp.quantile(lap_p, q).astype(jnp.float32)
    t = jnp.where(lap_p > thr, lap_p, 0.0)
    gmin = t.min()
    inv = 1.0 / (t.max() - gmin)        # NaN/Inf for a constant image (torch parity)
    scalars = jnp.stack([thr, gmin, inv]).astype(jnp.float32)

    # Kernel 2: threshold + normalize directly on (N,1,H,W) row tiles
    # (no flatten / pad / reshape round trips), scalars via SMEM.
    TR = H if H <= 256 else 256
    out = pl.pallas_call(
        _threshold_norm_kernel,
        out_shape=jax.ShapeDtypeStruct((N, 1, H, W), jnp.float32),
        grid=(N, pl.cdiv(H, TR)),
        in_specs=[pl.BlockSpec(memory_space=pltpu.MemorySpace.SMEM),
                  pl.BlockSpec((1, 1, TR, W), lambda n, r: (n, 0, r, 0))],
        out_specs=pl.BlockSpec((1, 1, TR, W), lambda n, r: (n, 0, r, 0)),
        compiler_params=pltpu.CompilerParams(
            dimension_semantics=("parallel", "parallel")),
    )(scalars, lap_p)
    return out


if __name__ == "__main__":
    key = jax.random.PRNGKey(0)
    x = jax.random.normal(key, (2, 3, 16, 16), dtype=jnp.float32)
    y = laplacian_filter(x)
    jax.block_until_ready(y)
    assert y.shape == (2, 1, 16, 16)
    print("KERNEL_OK")
</pallas_src>

<mosaic_0001>
module attributes {stable_mosaic.version = 11 : i64} {
  func.func @kernel(%arg0: i32, %arg1: i32, %arg2: memref<1x16x22xf32, #tpu.memory_space<vmem>>, %arg3: memref<1x16x22xf32, #tpu.memory_space<vmem>>, %arg4: memref<1x1x16x16xf32, #tpu.memory_space<vmem>>) attributes {dimension_semantics = [#tpu.dimension_semantics<parallel>, #tpu.dimension_semantics<parallel>], iteration_bounds = array<i64: 2, 1>, scalar_prefetch = 0 : i64, scratch_operands = 0 : i64, tpu.core_type = #tpu.core_type<tc>, window_params = [{transform_indices = @transform_0, window_bounds = array<i64: 1, 16, 22>}, {transform_indices = @transform_1, window_bounds = array<i64: 1, 16, 22>}, {transform_indices = @transform_2, window_bounds = array<i64: 1, 1, 16, 16>}]} {
    %c0 = arith.constant 0 : index
    %c0_0 = arith.constant 0 : index
    %c0_1 = arith.constant 0 : index
    %0 = vector.load %arg2[%c0, %c0_0, %c0_1] : memref<1x16x22xf32, #tpu.memory_space<vmem>>, vector<1x16x22xf32>
    %1 = vector.shape_cast %0 : vector<1x16x22xf32> to vector<16x22xf32>
    %c0_2 = arith.constant 0 : index
    %c0_3 = arith.constant 0 : index
    %c0_4 = arith.constant 0 : index
    %2 = vector.load %arg3[%c0_2, %c0_3, %c0_4] : memref<1x16x22xf32, #tpu.memory_space<vmem>>, vector<1x16x22xf32>
    %3 = vector.shape_cast %2 : vector<1x16x22xf32> to vector<16x22xf32>
    %4 = tpu.concatenate %1, %3 in 0 : vector<16x22xf32>, vector<16x22xf32> -> vector<32x22xf32>
    %5 = vector.extract_strided_slice %4 {offsets = [0, 0], sizes = [20, 22], strides = [1, 1]} : vector<32x22xf32> to vector<20x22xf32>
    %cst = arith.constant 0.0701593235 : f32
    %6 = vector.broadcast %cst : f32 to vector<20x22xf32>
    %7 = arith.mulf %6, %5 : vector<20x22xf32>
    %8 = vector.extract_strided_slice %4 {offsets = [1, 0], sizes = [20, 22], strides = [1, 1]} : vector<32x22xf32> to vector<20x22xf32>
    %cst_5 = arith.constant 0.131074876 : f32
    %9 = vector.broadcast %cst_5 : f32 to vector<20x22xf32>
    %10 = arith.mulf %9, %8 : vector<20x22xf32>
    %11 = arith.addf %7, %10 : vector<20x22xf32>
    %12 = vector.extract_strided_slice %4 {offsets = [2, 0], sizes = [20, 22], strides = [1, 1]} : vector<32x22xf32> to vector<20x22xf32>
    %cst_6 = arith.constant 0.190712824 : f32
    %13 = vector.broadcast %cst_6 : f32 to vector<20x22xf32>
    %14 = arith.mulf %13, %12 : vector<20x22xf32>
    %15 = arith.addf %11, %14 : vector<20x22xf32>
    %16 = vector.extract_strided_slice %4 {offsets = [3, 0], sizes = [20, 22], strides = [1, 1]} : vector<32x22xf32> to vector<20x22xf32>
    %cst_7 = arith.constant 0.216105938 : f32
    %17 = vector.broadcast %cst_7 : f32 to vector<20x22xf32>
    %18 = arith.mulf %17, %16 : vector<20x22xf32>
    %19 = arith.addf %15, %18 : vector<20x22xf32>
    %20 = vector.extract_strided_slice %4 {offsets = [4, 0], sizes = [20, 22], strides = [1, 1]} : vector<32x22xf32> to vector<20x22xf32>
    %cst_8 = arith.constant 0.190712824 : f32
    %21 = vector.broadcast %cst_8 : f32 to vector<20x22xf32>
    %22 = arith.mulf %21, %20 : vector<20x22xf32>
    %23 = arith.addf %19, %22 : vector<20x22xf32>
    %24 = vector.extract_strided_slice %4 {offsets = [5, 0], sizes = [20, 22], strides = [1, 1]} : vector<32x22xf32> to vector<20x22xf32>
    %cst_9 = arith.constant 0.131074876 : f32
    %25 = vector.broadcast %cst_9 : f32 to vector<20x22xf32>
    %26 = arith.mulf %25, %24 : vector<20x22xf32>
    %27 = arith.addf %23, %26 : vector<20x22xf32>
    %28 = vector.extract_strided_slice %4 {offsets = [6, 0], sizes = [20, 22], strides = [1, 1]} : vector<32x22xf32> to vector<20x22xf32>
    %cst_10 = arith.constant 0.0701593235 : f32
    %29 = vector.broadcast %cst_10 : f32 to vector<20x22xf32>
    %30 = arith.mulf %29, %28 : vector<20x22xf32>
    %31 = arith.addf %27, %30 : vector<20x22xf32>
    %32 = vector.extract_strided_slice %31 {offsets = [0, 0], sizes = [20, 16], strides = [1, 1]} : vector<20x22xf32> to vector<20x16xf32>
    %cst_11 = arith.constant 0.0701593235 : f32
    %33 = vector.broadcast %cst_11 : f32 to vector<20x16xf32>
    %34 = arith.mulf %33, %32 : vector<20x16xf32>
    %35 = vector.extract_strided_slice %31 {offsets = [0, 1], sizes = [20, 16], strides = [1, 1]} : vector<20x22xf32> to vector<20x16xf32>
    %cst_12 = arith.constant 0.131074876 : f32
    %36 = vector.broadcast %cst_12 : f32 to vector<20x16xf32>
    %37 = arith.mulf %36, %35 : vector<20x16xf32>
    %38 = arith.addf %34, %37 : vector<20x16xf32>
    %39 = vector.extract_strided_slice %31 {offsets = [0, 2], sizes = [20, 16], strides = [1, 1]} : vector<20x22xf32> to vector<20x16xf32>
    %cst_13 = arith.constant 0.190712824 : f32
    %40 = vector.broadcast %cst_13 : f32 to vector<20x16xf32>
    %41 = arith.mulf %40, %39 : vector<20x16xf32>
    %42 = arith.addf %38, %41 : vector<20x16xf32>
    %43 = vector.extract_strided_slice %31 {offsets = [0, 3], sizes = [20, 16], strides = [1, 1]} : vector<20x22xf32> to vector<20x16xf32>
    %cst_14 = arith.constant 0.216105938 : f32
    %44 = vector.broadcast %cst_14 : f32 to vector<20x16xf32>
    %45 = arith.mulf %44, %43 : vector<20x16xf32>
    %46 = arith.addf %42, %45 : vector<20x16xf32>
    %47 = vector.extract_strided_slice %31 {offsets = [0, 4], sizes = [20, 16], strides = [1, 1]} : vector<20x22xf32> to vector<20x16xf32>
    %cst_15 = arith.constant 0.190712824 : f32
    %48 = vector.broadcast %cst_15 : f32 to vector<20x16xf32>
    %49 = arith.mulf %48, %47 : vector<20x16xf32>
    %50 = arith.addf %46, %49 : vector<20x16xf32>
    %51 = vector.extract_strided_slice %31 {offsets = [0, 5], sizes = [20, 16], strides = [1, 1]} : vector<20x22xf32> to vector<20x16xf32>
    %cst_16 = arith.constant 0.131074876 : f32
    %52 = vector.broadcast %cst_16 : f32 to vector<20x16xf32>
    %53 = arith.mulf %52, %51 : vector<20x16xf32>
    %54 = arith.addf %50, %53 : vector<20x16xf32>
    %55 = vector.extract_strided_slice %31 {offsets = [0, 6], sizes = [20, 16], strides = [1, 1]} : vector<20x22xf32> to vector<20x16xf32>
    %cst_17 = arith.constant 0.0701593235 : f32
    %56 = vector.broadcast %cst_17 : f32 to vector<20x16xf32>
    %57 = arith.mulf %56, %55 : vector<20x16xf32>
    %58 = arith.addf %54, %57 : vector<20x16xf32>
    %59 = vector.extract_strided_slice %58 {offsets = [0, 0], sizes = [16, 16], strides = [1, 1]} : vector<20x16xf32> to vector<16x16xf32>
    %60 = vector.extract_strided_slice %58 {offsets = [4, 0], sizes = [16, 16], strides = [1, 1]} : vector<20x16xf32> to vector<16x16xf32>
    %61 = arith.addf %59, %60 : vector<16x16xf32>
    %62 = vector.extract_strided_slice %58 {offsets = [1, 0], sizes = [16, 16], strides = [1, 1]} : vector<20x16xf32> to vector<16x16xf32>
    %63 = vector.extract_strided_slice %58 {offsets = [3, 0], sizes = [16, 16], strides = [1, 1]} : vector<20x16xf32> to vector<16x16xf32>
    %64 = arith.addf %62, %63 : vector<16x16xf32>
    %65 = vector.extract_strided_slice %58 {offsets = [2, 0], sizes = [16, 16], strides = [1, 1]} : vector<20x16xf32> to vector<16x16xf32>
    %66 = vector.extract_strided_slice %61 {offsets = [0, 2], sizes = [16, 12], strides = [1, 1]} : vector<16x16xf32> to vector<16x12xf32>
    %cst_18 = arith.constant 0.000000e+00 : f32
    %67 = vector.broadcast %cst_18 : f32 to vector<16x12xf32>
    %68 = arith.subf %67, %66 : vector<16x12xf32>
    %69 = vector.extract_strided_slice %64 {offsets = [0, 1], sizes = [16, 12], strides = [1, 1]} : vector<16x16xf32> to vector<16x12xf32>
    %70 = arith.subf %68, %69 : vector<16x12xf32>
    %71 = vector.extract_strided_slice %64 {offsets = [0, 2], sizes = [16, 12], strides = [1, 1]} : vector<16x16xf32> to vector<16x12xf32>
    %cst_19 = arith.constant 2.000000e+00 : f32
    %72 = vector.broadcast %cst_19 : f32 to vector<16x12xf32>
    %73 = arith.mulf %72, %71 : vector<16x12xf32>
    %74 = arith.subf %70, %73 : vector<16x12xf32>
    %75 = vector.extract_strided_slice %64 {offsets = [0, 3], sizes = [16, 12], strides = [1, 1]} : vector<16x16xf32> to vector<16x12xf32>
    %76 = arith.subf %74, %75 : vector<16x12xf32>
    %77 = vector.extract_strided_slice %65 {offsets = [0, 0], sizes = [16, 12], strides = [1, 1]} : vector<16x16xf32> to vector<16x12xf32>
    %78 = arith.subf %76, %77 : vector<16x12xf32>
    %79 = vector.extract_strided_slice %65 {offsets = [0, 1], sizes = [16, 12], strides = [1, 1]} : vector<16x16xf32> to vector<16x12xf32>
    %cst_20 = arith.constant 2.000000e+00 : f32
    %80 = vector.broadcast %cst_20 : f32 to vector<16x12xf32>
    %81 = arith.mulf %80, %79 : vector<16x12xf32>
    %82 = arith.subf %78, %81 : vector<16x12xf32>
    %83 = vector.extract_strided_slice %65 {offsets = [0, 2], sizes = [16, 12], strides = [1, 1]} : vector<16x16xf32> to vector<16x12xf32>
    %cst_21 = arith.constant 1.600000e+01 : f32
    %84 = vector.broadcast %cst_21 : f32 to vector<16x12xf32>
    %85 = arith.mulf %84, %83 : vector<16x12xf32>
    %86 = arith.addf %82, %85 : vector<16x12xf32>
    %87 = vector.extract_strided_slice %65 {offsets = [0, 3], sizes = [16, 12], strides = [1, 1]} : vector<16x16xf32> to vector<16x12xf32>
    %cst_22 = arith.constant 2.000000e+00 : f32
    %88 = vector.broadcast %cst_22 : f32 to vector<16x12xf32>
    %89 = arith.mulf %88, %87 : vector<16x12xf32>
    %90 = arith.subf %86, %89 : vector<16x12xf32>
    %91 = vector.extract_strided_slice %65 {offsets = [0, 4], sizes = [16, 12], strides = [1, 1]} : vector<16x16xf32> to vector<16x12xf32>
    %92 = arith.subf %90, %91 : vector<16x12xf32>
    %93 = vector.extract_strided_slice %92 {offsets = [0, 0], sizes = [16, 1], strides = [1, 1]} : vector<16x12xf32> to vector<16x1xf32>
    %94 = vector.shape_cast %93 : vector<16x1xf32> to vector<16x1xf32>
    %95 = vector.broadcast %94 : vector<16x1xf32> to vector<16x2xf32>
    %96 = vector.extract_strided_slice %92 {offsets = [0, 11], sizes = [16, 1], strides = [1, 1]} : vector<16x12xf32> to vector<16x1xf32>
    %97 = vector.shape_cast %96 : vector<16x1xf32> to vector<16x1xf32>
    %98 = vector.broadcast %97 : vector<16x1xf32> to vector<16x2xf32>
    %99 = tpu.concatenate %95, %92, %98 in 1 : vector<16x2xf32>, vector<16x12xf32>, vector<16x2xf32> -> vector<16x16xf32>
    %c0_23 = arith.constant 0 : index
    %c0_24 = arith.constant 0 : index
    %c0_25 = arith.constant 0 : index
    %c0_26 = arith.constant 0 : index
    %100 = vector.load %arg4[%c0_23, %c0_24, %c0_25, %c0_26] : memref<1x1x16x16xf32, #tpu.memory_space<vmem>>, vector<1x1x16x16xf32>
    %101 = vector.shape_cast %100 : vector<1x1x16x16xf32> to vector<16x16xf32>
    %102 = vector.shape_cast %99 : vector<16x16xf32> to vector<1x1x16x16xf32>
    tpu.vector_store %arg4[%c0_23, %c0_24, %c0_25, %c0_26], %102 {strides = array<i32>} : memref<1x1x16x16xf32, #tpu.memory_space<vmem>>, vector<1x1x16x16xf32>,
    return
  }
  func.func @transform_0(%arg0: i32, %arg1: i32) -> (i32, i32, i32) {
    %c0_i32 = arith.constant 0 : i32
    %c0_i32_0 = arith.constant 0 : i32
    return %arg0, %arg1, %c0_i32 : i32, i32, i32
  }
  func.func @transform_1(%arg0: i32, %arg1: i32) -> (i32, i32, i32) {
    %c1_i32 = arith.constant 1 : i32
    %0 = arith.addi %arg1, %c1_i32 : i32
    %c1_i32_0 = arith.constant 1 : i32
    %1 = arith.muli %0, %c1_i32_0 : i32
    %c0_i32 = arith.constant 0 : i32
    %c0_i32_1 = arith.constant 0 : i32
    return %arg0, %1, %c0_i32 : i32, i32, i32
  }
  func.func @transform_2(%arg0: i32, %arg1: i32) -> (i32, i32, i32, i32) {
    %c0_i32 = arith.constant 0 : i32
    %c0_i32_0 = arith.constant 0 : i32
    %c0_i32_1 = arith.constant 0 : i32
    return %arg0, %c0_i32, %arg1, %c0_i32_0 : i32, i32, i32, i32
  }
}

</mosaic_0001>

<llo_original>
// kernel: tpu_custom_call.1
$region0: #{tpu_custom_call.1}
  #allocation0 [shape = 'u32[]', space=smem, size = 0x4, offset = 0x4, fixed_abs, tag = 'smem constant byte address 0x4 - core index']
  #allocation1 [shape = 'u32[144,128]{1,0:T(1,128)}', space=vmem, size = 0x12000, scoped, tag = 'internal scratch']
  %s0 = inlined_call_operand.vmem [shape: f32[2,32,22], index: 0, kind: input, shape index: {}]
  %s1 = inlined_call_operand.vmem [shape: f32[2,32,22], index: 1, kind: input, shape index: {}]
  %s2 = inlined_call_operand.hbm [shape: f32[2,1,16,16], index: 2, kind: output, shape index: {}]
  %s3 = sld [smem:[#allocation0]]
  $region41: #{tpu_custom_call.1} parent=0
    _
  %s5 = ssub.s32 1, %s3
  %s6 = scalar_select 0, %s5, %s3
  $region1: #{tpu_custom_call.1} parent=0
    #allocation2 [shape = 'u8[16384]{0}', space=vmem, size = 0x4000, scoped, tag = 'output window, operand 0']
    #allocation3 [shape = 's32[2]{0}', space=sflag, size = 0x8, scoped, tag = 'scoped memory for tpu_custom_call.1']
    %7 = vsyncpa [#allocation3], 0
    %s8 = scalar_lea.sflag [#allocation3], 1
    %9 = vsyncpa %s8, 0
    loop: start=0, step=1, limit=4
    $region2: #{tpu_custom_call.1} parent=1 // loop_pre_header
      _
    $region3: #{tpu_custom_call.1} parent=1 // loop_header
      %s11 = sphi 0, %s15
      %p12 = scmp.ge.s32.totalorder %s11, 4
      %s18 = sphi 0, %s30
      %s19 = sphi 0, %s26
      %s20 = sphi 0, %s18
      %s21 = sphi 0, %s19
      %s22 = sphi 0, %s20
      %s23 = sphi 0, %s21
      %s35 = sphi 0, %s37
      %s38 = sphi 0, %s35
      %s39 = sphi 0, %s38
      %s55 = sphi 0, %s39
      %s65 = sphi 0, %s67
      %s68 = sphi 0, %s65
      %s69 = sphi 0, %s68
      %s85 = sphi 0, %s69
      %s93 = sphi 0, %s95
      %s96 = sphi 0, %s93
      %s97 = sphi 0, %s96
      %s113 = sphi 0, %s97
    $region4: #{tpu_custom_call.1} parent=1 // loop_header_branch
      %14 = sbr.rel (%p12) target = $region8
    $region5: #{tpu_custom_call.1} parent=1 // loop_body
      %s16 = ssub.s32 %s11, 1
      %s17 = ssub.s32 %s11, 2
      %s24 = sadd.s32 1, %s19
      %p25 = scmp.ge.s32.totalorder %s24, 1
      %s26 = scalar_select %p25, 0, %s24
      %s27 = sadd.s32 1, %s18
      %s28 = scalar_select %p25, %s27, %s18
      %p29 = scmp.ge.s32.totalorder %s28, 2
      %s30 = scalar_select %p29, 0, %s28
      %s31 = ssub.s32 %s18, %s30
      %s32 = ssub.s32 %s19, %s26
      %s33 = sor.u32 %s31, %s32
      %p34 = scmp.eq.s32.totalorder %s33, 0
      %s36 = sadd.s32 %s35, 1
      %s37 = scalar_select %p34, %s35, %s36
      %p40 = pneg %p34
      %p41 = scmp.eq.s32.totalorder %s11, 1
      %p42 = por %p40, %p41
      %p43 = scmp.ne.s32.totalorder %s35, %s38
      %p44 = scmp.eq.s32.totalorder %s11, 0
      %p45 = por %p43, %p44
      %p46 = scmp.ne.s32.totalorder %s35, %s38
      %p47 = scmp.eq.s32.totalorder %s16, 1
      %p48 = por %p46, %p47
      %p49 = scmp.ne.s32.totalorder %s38, %s39
      %p50 = scmp.eq.s32.totalorder %s16, 0
      %p51 = por %p49, %p50
      %p52 = scmp.ne.s32.totalorder %s38, %s39
      %p53 = scmp.eq.s32.totalorder %s17, 1
      %p54 = por %p52, %p53
      %p56 = scmp.ne.s32.totalorder %s39, %s55
      %p57 = scmp.eq.s32.totalorder %s17, 0
      %p58 = por %p56, %p57
      %s59 = sadd.s32 %s19, 1
      %s60 = sadd.s32 %s26, 1
      %s61 = ssub.s32 %s18, %s30
      %s62 = ssub.s32 %s59, %s60
      %s63 = sor.u32 %s61, %s62
      %p64 = scmp.eq.s32.totalorder %s63, 0
      %s66 = sadd.s32 %s65, 1
      %s67 = scalar_select %p64, %s65, %s66
      %p70 = pneg %p64
      %p71 = scmp.eq.s32.totalorder %s11, 1
      %p72 = por %p70, %p71
      %p73 = scmp.ne.s32.totalorder %s65, %s68
      %p74 = scmp.eq.s32.totalorder %s11, 0
      %p75 = por %p73, %p74
      %p76 = scmp.ne.s32.totalorder %s65, %s68
      %p77 = scmp.eq.s32.totalorder %s16, 1
      %p78 = por %p76, %p77
      %p79 = scmp.ne.s32.totalorder %s68, %s69
      %p80 = scmp.eq.s32.totalorder %s16, 0
      %p81 = por %p79, %p80
      %p82 = scmp.ne.s32.totalorder %s68, %s69
      %p83 = scmp.eq.s32.totalorder %s17, 1
      %p84 = por %p82, %p83
      %p86 = scmp.ne.s32.totalorder %s69, %s85
      %p87 = scmp.eq.s32.totalorder %s17, 0
      %p88 = por %p86, %p87
      %s89 = ssub.s32 %s18, %s30
      %s90 = ssub.s32 %s19, %s26
      %s91 = sor.u32 %s89, %s90
      %p92 = scmp.eq.s32.totalorder %s91, 0
      %s94 = sadd.s32 %s93, 1
      %s95 = scalar_select %p92, %s93, %s94
      %p98 = pneg %p92
      %p99 = scmp.eq.s32.totalorder %s11, 1
      %p100 = por %p98, %p99
      %p101 = scmp.ne.s32.totalorder %s93, %s96
      %p102 = scmp.eq.s32.totalorder %s11, 0
      %p103 = por %p101, %p102
      %p104 = scmp.ne.s32.totalorder %s93, %s96
      %p105 = scmp.eq.s32.totalorder %s16, 1
      %p106 = por %p104, %p105
      %p107 = scmp.ne.s32.totalorder %s96, %s97
      %p108 = scmp.eq.s32.totalorder %s16, 0
      %p109 = por %p107, %p108
      %p110 = scmp.ne.s32.totalorder %s96, %s97
      %p111 = scmp.eq.s32.totalorder %s17, 1
      %p112 = por %p110, %p111
      %p114 = scmp.ne.s32.totalorder %s97, %s113
      %p115 = scmp.eq.s32.totalorder %s17, 0
      %p116 = por %p114, %p115
      %p117 = scmp.le.s32.totalorder 1, %s11
      %p118 = scmp.lt.s32.totalorder %s11, 3
      %p119 = pnand %p117, %p118
      %p120 = pneg %p119
      // Predicated region
      $region9: #{tpu_custom_call.1} parent=5 // pred_check
        _
      $region10: #{tpu_custom_call.1} parent=5 // pred_check_branch
        %122 = sbr.rel (%p119) target = $region12
      $region11: #{tpu_custom_call.1} parent=5 // pred_region
        %s123 = ssub.s32 %s11, 1
      $region12: #{tpu_custom_call.1} parent=5 // pred_fallthru
        _
      %p124 = scmp.lt.s32.totalorder %s11, 2
      // Predicated region
      $region13: #{tpu_custom_call.1} parent=5 // pred_check
        %p125 = pneg %p124
      $region14: #{tpu_custom_call.1} parent=5 // pred_check_branch
        %127 = sbr.rel (%p125) target = $region16
      $region15: #{tpu_custom_call.1} parent=5 // pred_region
        // Predicated region
        $region17: #{tpu_custom_call.1} parent=15 // pred_check
          %p128 = pneg %p45
        $region18: #{tpu_custom_call.1} parent=15 // pred_check_branch
          %130 = sbr.rel (%p128) target = $region20
        $region19: #{tpu_custom_call.1} parent=15 // pred_region
          %s131 = smul.u32 2, %s19
          %p132 = scmp.lt.s32.totalorder %s18, 1
          %s133 = scalar_select %p132, %s18, 1
          %p134 = scmp.lt.s32.totalorder %s131, 3
          %s135 = scalar_select %p134, %s131, 3
          %s136 = smul.addr %s133, 4
          %s137 = sadd.s32 %s135, %s136
          %s138 = smul.addr %s137, 8
          %s139 = scalar_lea.vmem %s0, %s138
          %s140 = smul.u32 2, %s19
        $region20: #{tpu_custom_call.1} parent=15 // pred_fallthru
          _
        // Predicated region
        $region21: #{tpu_custom_call.1} parent=15 // pred_check
          %p141 = pneg %p75
        $region22: #{tpu_custom_call.1} parent=15 // pred_check_branch
          %143 = sbr.rel (%p141) target = $region24
        $region23: #{tpu_custom_call.1} parent=15 // pred_region
          %s144 = sadd.s32 %s19, 1
          %s145 = smul.u32 2, %s144
          %p146 = scmp.lt.s32.totalorder %s18, 1
          %s147 = scalar_select %p146, %s18, 1
          %p148 = scmp.lt.s32.totalorder %s145, 3
          %s149 = scalar_select %p148, %s145, 3
          %s150 = smul.addr %s147, 4
          %s151 = sadd.s32 %s149, %s150
          %s152 = smul.addr %s151, 8
          %s153 = scalar_lea.vmem %s1, %s152
          %s154 = sadd.s32 %s19, 1
          %s155 = smul.u32 2, %s154
        $region24: #{tpu_custom_call.1} parent=15 // pred_fallthru
          _
      $region16: #{tpu_custom_call.1} parent=5 // pred_fallthru
        _
      %p156 = scmp.le.s32.totalorder 1, %s11
      %p157 = scmp.lt.s32.totalorder %s11, 3
      %p158 = pnand %p156, %p157
      %p159 = pneg %p158
      // Predicated region
      $region25: #{tpu_custom_call.1} parent=5 // pred_check
        _
      $region26: #{tpu_custom_call.1} parent=5 // pred_check_branch
        %161 = sbr.rel (%p158) target = $region28
      $region27: #{tpu_custom_call.1} parent=5 // pred_region
        %s162 = ssub.s32 %s11, 1
        %s163 = smul.u32 2, %s21
        %p164 = scmp.lt.s32.totalorder %s20, 1
        %s165 = scalar_select %p164, %s20, 1
        %p166 = scmp.lt.s32.totalorder %s163, 3
        %s167 = scalar_select %p166, %s163, 3
        %s168 = smul.addr %s165, 4
        %s169 = sadd.s32 %s167, %s168
        %s170 = smul.addr %s169, 8
        %s171 = scalar_lea.vmem %s0, %s170
        %p172 = pneg %p51
        %p173 = pneg %p48
        %s174 = sadd.s32 %s21, 1
        %s175 = smul.u32 2, %s174
        %p176 = scmp.lt.s32.totalorder %s20, 1
        %s177 = scalar_select %p176, %s20, 1
        %p178 = scmp.lt.s32.totalorder %s175, 3
        %s179 = scalar_select %p178, %s175, 3
        %s180 = smul.addr %s177, 4
        %s181 = sadd.s32 %s179, %s180
        %s182 = smul.addr %s181, 8
        %s183 = scalar_lea.vmem %s1, %s182
        %p184 = pneg %p81
        %p185 = pneg %p78
        %p186 = pneg %p109
        %p187 = pneg %p106
        %s188 = sand.u32 %s96, 1
        %s189 = scalar_lea.sflag [#allocation3], %s188
        %s190 = sand.u32 %s96, 1
        %s191 = smul.addr %s190, 16
        %s192 = scalar_lea.vmem [#allocation2], %s191
        %s193 = smul.u32 2, %s21
        %p194 = scmp.lt.s32.totalorder %s20, 1
        %s195 = scalar_select %p194, %s20, 1
        %p196 = scmp.lt.s32.totalorder %s193, 3
        %s197 = scalar_select %p196, %s193, 3
        %s198 = smul.addr %s195, 4
        %s199 = sadd.s32 %s197, %s198
        %s200 = smul.addr %s199, 8
        %s201 = scalar_lea.vmem %s0, %s200
        %s202 = smul.u32 2, %s21
        %s203 = sadd.s32 %s21, 1
        %s204 = smul.u32 2, %s203
        %p205 = scmp.lt.s32.totalorder %s20, 1
        %s206 = scalar_select %p205, %s20, 1
        %p207 = scmp.lt.s32.totalorder %s204, 3
        %s208 = scalar_select %p207, %s204, 3
        %s209 = smul.addr %s206, 4
        %s210 = sadd.s32 %s208, %s209
        %s211 = smul.addr %s210, 8
        %s212 = scalar_lea.vmem %s1, %s211
        %s213 = sadd.s32 %s21, 1
        %s214 = smul.u32 2, %s213
        %s215 = smul.u32 2, %s21
        %v216 = vld [vmem:[%s201] sm:$0xff]
        %v217 = vld [vmem:[%s201 + $0x8] sm:$0xff]
        %v218 = vld [vmem:[%s212] sm:$0xff]
        %v219 = vld [vmem:[%s212 + $0x8] sm:$0xff]
        %v220 = vmul.f32 %v216, 0.07015932
        %v221 = vmul.f32 %v217, 0.07015932
        %v222 = vmul.f32 %v218, 0.07015932
        %v223 = vmul.f32 %v216, 0.13107488
        %v224 = vmul.f32 %v217, 0.13107488
        %v225 = vmul.f32 %v218, 0.13107488
        %vm229 = vcmask 1046528
        %v230 = vrot.slane %v223, 1
        %v231 = vrot.slane %v224, 1
        %v232 = vsel %vm229, %v230, %v231
        %v233 = vrot.slane %v225, 1
        %v234 = vsel %vm229, %v231, %v233
        %v238 = vadd.f32 %v220, %v232
        %v239 = vadd.f32 %v221, %v234
        %v240 = vadd.f32 %v222, %v233
        %v241 = vmul.f32 %v216, 0.19071282
        %v242 = vmul.f32 %v217, 0.19071282
        %v243 = vmul.f32 %v218, 0.19071282
        %vm247 = vcmask 1045504
        %v248 = vrot.slane %v241, 2
        %v249 = vrot.slane %v242, 2
        %v250 = vsel %vm247, %v248, %v249
        %v251 = vrot.slane %v243, 2
        %v252 = vsel %vm247, %v249, %v251
        %v256 = vadd.f32 %v238, %v250
        %v257 = vadd.f32 %v239, %v252
        %v258 = vadd.f32 %v240, %v251
        %v259 = vmul.f32 %v216, 0.21610594
        %v260 = vmul.f32 %v217, 0.21610594
        %v261 = vmul.f32 %v218, 0.21610594
        %vm265 = vcmask 1044480
        %v266 = vrot.slane %v259, 3
        %v267 = vrot.slane %v260, 3
        %v268 = vsel %vm265, %v266, %v267
        %v269 = vrot.slane %v261, 3
        %v270 = vsel %vm265, %v267, %v269
        %v274 = vadd.f32 %v256, %v268
        %v275 = vadd.f32 %v257, %v270
        %v276 = vadd.f32 %v258, %v269
        %vm277 = vcmask 1043456
        %v278 = vrot.slane %v241, 4
        %v279 = vrot.slane %v242, 4
        %v280 = vsel %vm277, %v278, %v279
        %v281 = vrot.slane %v243, 4
        %v282 = vsel %vm277, %v279, %v281
        %v286 = vadd.f32 %v274, %v280
        %v287 = vadd.f32 %v275, %v282
        %v288 = vadd.f32 %v276, %v281
        %v289 = vmul.f32 %v219, 0.13107488
        %vm291 = vcmask 1042432
        %v292 = vrot.slane %v223, 5
        %v293 = vrot.slane %v224, 5
        %v294 = vsel %vm291, %v292, %v293
        %v295 = vrot.slane %v225, 5
        %v296 = vsel %vm291, %v293, %v295
        %v297 = vrot.slane %v289, 5
        %v298 = vsel %vm291, %v295, %v297
        %v302 = vadd.f32 %v286, %v294
        %v303 = vadd.f32 %v287, %v296
        %v304 = vadd.f32 %v288, %v298
        %v305 = vmul.f32 %v219, 0.07015932
        %vm310 = vcmask 1041408
        %v311 = vrot.slane %v220, 6
        %v312 = vrot.slane %v221, 6
        %v313 = vsel %vm310, %v311, %v312
        %v314 = vrot.slane %v222, 6
        %v315 = vsel %vm310, %v312, %v314
        %v316 = vrot.slane %v305, 6
        %v317 = vsel %vm310, %v314, %v316
        %v321 = vadd.f32 %v302, %v313
        %v322 = vadd.f32 %v303, %v315
        %v323 = vadd.f32 %v304, %v317
        %v324 = vmul.f32 %v321, 0.07015932
        %v325 = vmul.f32 %v322, 0.07015932
        %v326 = vmul.f32 %v323, 0.07015932
        %v327 = vmul.f32 %v321, 0.13107488
        %v328 = vmul.f32 %v322, 0.13107488
        %v329 = vmul.f32 %v323, 0.13107488
        %333 = vrot.lane.b32.xlu0 %v327, 127
        %v334 = vpop.permute.xlu0 %333
        %335 = vrot.lane.b32.xlu0 %v328, 127
        %v336 = vpop.permute.xlu0 %335
        %337 = vrot.lane.b32.xlu0 %v329, 127
        %v338 = vpop.permute.xlu0 %337
        %v342 = vadd.f32 %v324, %v334
        %v343 = vadd.f32 %v325, %v336
        %v344 = vadd.f32 %v326, %v338
        %v345 = vmul.f32 %v321, 0.19071282
        %v346 = vmul.f32 %v322, 0.19071282
        %v347 = vmul.f32 %v323, 0.19071282
        %351 = vrot.lane.b32.xlu0 %v345, 126
        %v352 = vpop.permute.xlu0 %351
        %353 = vrot.lane.b32.xlu0 %v346, 126
        %v354 = vpop.permute.xlu0 %353
        %355 = vrot.lane.b32.xlu0 %v347, 126
        %v356 = vpop.permute.xlu0 %355
        %v360 = vadd.f32 %v342, %v352
        %v361 = vadd.f32 %v343, %v354
        %v362 = vadd.f32 %v344, %v356
        %v363 = vmul.f32 %v321, 0.21610594
        %v364 = vmul.f32 %v322, 0.21610594
        %v365 = vmul.f32 %v323, 0.21610594
        %369 = vrot.lane.b32.xlu0 %v363, 125
        %v370 = vpop.permute.xlu0 %369
        %371 = vrot.lane.b32.xlu0 %v364, 125
        %v372 = vpop.permute.xlu0 %371
        %373 = vrot.lane.b32.xlu0 %v365, 125
        %v374 = vpop.permute.xlu0 %373
        %v378 = vadd.f32 %v360, %v370
        %v379 = vadd.f32 %v361, %v372
        %v380 = vadd.f32 %v362, %v374
        %381 = vrot.lane.b32.xlu0 %v345, 124
        %v382 = vpop.permute.xlu0 %381
        %383 = vrot.lane.b32.xlu0 %v346, 124
        %v384 = vpop.permute.xlu0 %383
        %385 = vrot.lane.b32.xlu0 %v347, 124
        %v386 = vpop.permute.xlu0 %385
        %v390 = vadd.f32 %v378, %v382
        %v391 = vadd.f32 %v379, %v384
        %v392 = vadd.f32 %v380, %v386
        %393 = vrot.lane.b32.xlu0 %v327, 123
        %v394 = vpop.permute.xlu0 %393
        %395 = vrot.lane.b32.xlu0 %v328, 123
        %v396 = vpop.permute.xlu0 %395
        %397 = vrot.lane.b32.xlu0 %v329, 123
        %v398 = vpop.permute.xlu0 %397
        %v402 = vadd.f32 %v390, %v394
        %v403 = vadd.f32 %v391, %v396
        %v404 = vadd.f32 %v392, %v398
        %408 = vrot.lane.b32.xlu0 %v324, 122
        %v409 = vpop.permute.xlu0 %408
        %410 = vrot.lane.b32.xlu0 %v325, 122
        %v411 = vpop.permute.xlu0 %410
        %412 = vrot.lane.b32.xlu0 %v326, 122
        %v413 = vpop.permute.xlu0 %412
        %v417 = vadd.f32 %v402, %v409
        %v418 = vadd.f32 %v403, %v411
        %v419 = vadd.f32 %v404, %v413
        %v423 = vrot.slane %v417, 4
        %v424 = vrot.slane %v418, 4
        %v425 = vsel %vm277, %v423, %v424
        %v426 = vrot.slane %v419, 4
        %v427 = vsel %vm277, %v424, %v426
        %v430 = vadd.f32 %v417, %v425
        %v431 = vadd.f32 %v418, %v427
        %v432 = vrot.slane %v417, 2
        %v433 = vrot.slane %v418, 2
        %v434 = vsel %vm247, %v432, %v433
        %v435 = vrot.slane %v419, 2
        %v436 = vsel %vm247, %v433, %v435
        %v440 = vadd.f32 %v417, %v434
        %v441 = vadd.f32 %v418, %v436
        %v442 = vadd.f32 %v419, %v435
        %v443 = vsub.f32 0.0, %v430
        %v444 = vsub.f32 0.0, %v431
        %v448 = vrot.slane %v440, 1
        %v449 = vrot.slane %v441, 1
        %v450 = vsel %vm229, %v448, %v449
        %v451 = vrot.slane %v442, 1
        %v452 = vsel %vm229, %v449, %v451
        %453 = vrot.lane.b32.xlu0 %v450, 1
        %v454 = vpop.permute.xlu0 %453
        %455 = vrot.lane.b32.xlu0 %v452, 1
        %v456 = vpop.permute.xlu0 %455
        %v459 = vsub.f32 %v443, %v454
        %v460 = vsub.f32 %v444, %v456
        %v461 = vmul.f32 %v440, 2.0
        %v462 = vmul.f32 %v441, 2.0
        %v463 = vmul.f32 %v442, 2.0
        %v467 = vrot.slane %v461, 1
        %v468 = vrot.slane %v462, 1
        %v469 = vsel %vm229, %v467, %v468
        %v470 = vrot.slane %v463, 1
        %v471 = vsel %vm229, %v468, %v470
        %v474 = vsub.f32 %v459, %v469
        %v475 = vsub.f32 %v460, %v471
        %476 = vrot.lane.b32.xlu0 %v450, 127
        %v477 = vpop.permute.xlu0 %476
        %478 = vrot.lane.b32.xlu0 %v452, 127
        %v479 = vpop.permute.xlu0 %478
        %v482 = vsub.f32 %v474, %v477
        %v483 = vsub.f32 %v475, %v479
        %484 = vrot.lane.b32.xlu0 %v434, 2
        %v485 = vpop.permute.xlu0 %484
        %486 = vrot.lane.b32.xlu0 %v436, 2
        %v487 = vpop.permute.xlu0 %486
        %v490 = vsub.f32 %v482, %v485
        %v491 = vsub.f32 %v483, %v487
        %v492 = vmul.f32 %v417, 2.0
        %v493 = vmul.f32 %v418, 2.0
        %v494 = vmul.f32 %v419, 2.0
        %v498 = vrot.slane %v492, 2
        %v499 = vrot.slane %v493, 2
        %v500 = vsel %vm247, %v498, %v499
        %v501 = vrot.slane %v494, 2
        %v502 = vsel %vm247, %v499, %v501
        %503 = vrot.lane.b32.xlu0 %v500, 1
        %v504 = vpop.permute.xlu0 %503
        %505 = vrot.lane.b32.xlu0 %v502, 1
        %v506 = vpop.permute.xlu0 %505
        %v509 = vsub.f32 %v490, %v504
        %v510 = vsub.f32 %v491, %v506
        %v511 = vmul.f32 %v417, 16.0
        %v512 = vmul.f32 %v418, 16.0
        %v513 = vmul.f32 %v419, 16.0
        %v517 = vrot.slane %v511, 2
        %v518 = vrot.slane %v512, 2
        %v519 = vsel %vm247, %v517, %v518
        %v520 = vrot.slane %v513, 2
        %v521 = vsel %vm247, %v518, %v520
        %v524 = vadd.f32 %v509, %v519
        %v525 = vadd.f32 %v510, %v521
        %526 = vrot.lane.b32.xlu0 %v500, 127
        %v527 = vpop.permute.xlu0 %526
        %528 = vrot.lane.b32.xlu0 %v502, 127
        %v529 = vpop.permute.xlu0 %528
        %v532 = vsub.f32 %v524, %v527
        %v533 = vsub.f32 %v525, %v529
        %534 = vrot.lane.b32.xlu0 %v434, 126
        %v535 = vpop.permute.xlu0 %534
        %536 = vrot.lane.b32.xlu0 %v436, 126
        %v537 = vpop.permute.xlu0 %536
        %v540 = vsub.f32 %v532, %v535
        %v541 = vsub.f32 %v533, %v537
        %543 = vset.pattern.permute.xlu0 2
        %544 = vperm.xlu0 %543, %v540
        %v545 = vpop.permute.xlu0 %544
        %548 = vset.pattern.permute.xlu0 2
        %549 = vperm.xlu0 %548, %v541
        %v550 = vpop.permute.xlu0 %549
        %552 = vset.pattern.permute.xlu0 13
        %553 = vperm.xlu0 %552, %v540
        %v554 = vpop.permute.xlu0 %553
        %556 = vset.pattern.permute.xlu0 13
        %557 = vperm.xlu0 %556, %v541
        %v558 = vpop.permute.xlu0 %557
        %vm560 = vcmask 15360
        %v561 = vsel %vm560, %v545, %v540
        %v562 = vsel %vm560, %v550, %v541
        %vm563 = vcmask 113664
        %v564 = vsel %vm563, %v561, %v554
        %v565 = vsel %vm563, %v562, %v558
        %vm566 = vcmask 130048
        %567 = vst.msk [vmem:[%s192] sm:$0xff] %vm566, %v564
        %568 = vst.msk [vmem:[%s192 + $0x8] sm:$0xff] %vm566, %v565
        %s569 = sand.u32 %s96, 1
        %s570 = scalar_lea.sflag [#allocation3], %s569
        %s571 = sand.u32 %s96, 1
        %s572 = smul.addr %s571, 16
        %s573 = scalar_lea.vmem [#allocation2], %s572
        // Predicated region
        $region29: #{tpu_custom_call.1} parent=27 // pred_check
          %p574 = pneg %p106
        $region30: #{tpu_custom_call.1} parent=27 // pred_check_branch
          %576 = sbr.rel (%p574) target = $region32
        $region31: #{tpu_custom_call.1} parent=27 // pred_region
          %s577 = smul.u32 2, %s21
          %s579 = ssub.s32 256, 256
          %580 = vsyncadd %s570, %s579
          %s581 = smul.addr %s20, 2
          %s582 = sadd.s32 %s577, %s581
          %s583 = smul.addr %s582, 128
          %s584 = scalar_lea.hbm %s2, %s583
          %s585 = sshll.u32 %s573, 4
          %s586 = int_to_ptr.vmem [resolvable:$true] %s585
          %591 = dma.vmem_to_hbm [thread:$0]  %s586, 256, %s584, %s570, 128, 128, 8
        $region32: #{tpu_custom_call.1} parent=27 // pred_fallthru
          _
      $region28: #{tpu_custom_call.1} parent=5 // pred_fallthru
        _
      %p592 = scmp.le.s32.totalorder 2, %s11
      // Predicated region
      $region33: #{tpu_custom_call.1} parent=5 // pred_check
        %p593 = pneg %p592
      $region34: #{tpu_custom_call.1} parent=5 // pred_check_branch
        %595 = sbr.rel (%p593) target = $region36
      $region35: #{tpu_custom_call.1} parent=5 // pred_region
        %s596 = ssub.s32 %s11, 2
        // Predicated region
        $region37: #{tpu_custom_call.1} parent=35 // pred_check
          %p597 = pneg %p112
        $region38: #{tpu_custom_call.1} parent=35 // pred_check_branch
          %599 = sbr.rel (%p597) target = $region40
        $region39: #{tpu_custom_call.1} parent=35 // pred_region
          %s600 = sand.u32 %s97, 1
          %s601 = scalar_lea.sflag [#allocation3], %s600
          %s602 = sand.u32 %s97, 1
          %s603 = smul.addr %s602, 16
          %s604 = scalar_lea.vmem [#allocation2], %s603
          %605 = dma.done %s601, 256
        $region40: #{tpu_custom_call.1} parent=35 // pred_fallthru
          _
      $region36: #{tpu_custom_call.1} parent=5 // pred_fallthru
        _
    $region6: #{tpu_custom_call.1} parent=1 // loop_footer
      %s15 = sadd.s32 1, %s11
    $region7: #{tpu_custom_call.1} parent=1 // loop_footer_branch
      %10 = sbr.rel target = $region3
    $region8: #{tpu_custom_call.1} parent=1 // loop_exit
      _
    %606 = vsyncpa [#allocation3], 1
    %s607 = scalar_lea.sflag [#allocation3], 1
    %608 = vsyncpa %s607, 1

</llo_original>
